<compile_context>
chip_gen: v7x
topology: tpu7x:2x2x1
jax: 0.10.0
libtpu: 0.0.40
codegen_flags: <defaults>
</compile_context>

<pallas_src>
import jax
import jax.numpy as jnp
from jax.experimental import pallas as pl
from jax.experimental.pallas import tpu as pltpu


def _round_up(x, m):
    return ((x + m - 1) // m) * m


def _sum2d(x):
    # Full reduction of a 2-D array while staying 2-D ((1, 1) result).
    return jnp.sum(jnp.sum(x, axis=1, keepdims=True), axis=0, keepdims=True)


def _fastspeech2_loss_kernel(
    # streamed (tiled) mel inputs
    mel_tgt_ref, mel_pred_ref, eps_pred_ref, mel_mask_ref,
    # small resident inputs
    pitch_tgt_ref, pitch_pred_ref, pitch_mask_ref,
    energy_tgt_ref, energy_pred_ref, energy_mask_ref,
    dur_tgt_ref, logdur_pred_ref, src_mask_ref,
    # per-split partial-sum outputs
    mel_out_ref, eps_out_ref, small_out_ref,
):
    split = pl.program_id(0)   # "parallel" axis (2-way split, megacore on v7x)
    step = pl.program_id(1)    # "arbitrary" reduction axis over row tiles

    # ---- step 0: zero the accumulators and compute the small (resident) losses once
    @pl.when(step == 0)
    def _init_and_small_losses():
        mel_out_ref[...] = jnp.zeros_like(mel_out_ref)
        eps_out_ref[...] = jnp.zeros_like(eps_out_ref)

        dp = pitch_pred_ref[...].astype(jnp.float32) - pitch_tgt_ref[...].astype(jnp.float32)
        de = energy_pred_ref[...].astype(jnp.float32) - energy_tgt_ref[...].astype(jnp.float32)
        logdur_tgt = jnp.log(dur_tgt_ref[...].astype(jnp.float32) + 1.0)
        dd = logdur_pred_ref[...].astype(jnp.float32) - logdur_tgt

        pitch_sq = _sum2d(dp * dp * pitch_mask_ref[...])
        energy_sq = _sum2d(de * de * energy_mask_ref[...])
        dur_sq = _sum2d(dd * dd * src_mask_ref[...])

        # Only split 0 contributes the small losses (avoid double counting).
        scale = jnp.where(split == 0, 1.0, 0.0).astype(jnp.float32)
        row = jnp.concatenate(
            [pitch_sq, energy_sq, dur_sq, jnp.zeros((1, 5), jnp.float32)], axis=1
        ) * scale
        small_out_ref[...] = row[None]          # (1, 1, 8)

    # ---- steady state: masked L1 partial sums for the mel / postnet paths
    keep = mel_mask_ref[...] > 0.5              # (tile_r, 1); zero-padded -> also kills
                                                # partial-block / duplicate-block garbage
    tgt = mel_tgt_ref[...].astype(jnp.float32)
    d_mel = jnp.where(keep, jnp.abs(mel_pred_ref[...].astype(jnp.float32) - tgt), 0.0)
    d_eps = jnp.where(keep, jnp.abs(eps_pred_ref[...].astype(jnp.float32) - tgt), 0.0)

    # Accumulate per-lane (per-mel-bin) sums in f32; final lane sum happens in the wrapper.
    mel_out_ref[...] += jnp.sum(d_mel, axis=0, keepdims=True)[None]   # (1, 1, n_mels)
    eps_out_ref[...] += jnp.sum(d_eps, axis=0, keepdims=True)[None]


class FastSpeech2LossPallas:
    """FastSpeech2 Loss (Pallas TPU, tiled + pipelined)."""

    def __init__(self, preprocess_config, model_config, *, tile_rows=1024, num_splits=2):
        self.pitch_feature_level = preprocess_config["preprocessing"]["pitch"]["feature"]
        self.energy_feature_level = preprocess_config["preprocessing"]["energy"]["feature"]
        assert tile_rows % 8 == 0, "tile_rows must be a multiple of 8 (sublane tiling)"
        # tile_rows=1024 keeps the working set ~3 MiB -> fits v7x (64 MiB VMEM) with
        # plenty of headroom; sweep larger values (2048-4096) on v5e/v6e if desired.
        self.tile_rows = tile_rows
        # num_splits=2 lets the two v7x TensorCores stream disjoint row ranges;
        # harmless (serial) on single-core chips.
        self.num_splits = num_splits

    def __call__(self, inputs, predictions):
        mel_targets, _, _, pitch_targets, energy_targets, duration_targets = inputs[6:]
        (mel_predictions, epsilon_denoise_prediction, pitch_predictions,
         energy_predictions, log_duration_predictions, _,
         src_masks, mel_masks, _, _) = predictions

        # PyTorch: src_masks / mel_masks are True on padding, then inverted.
        src_valid = jnp.logical_not(src_masks).astype(jnp.float32)   # (B, T_src)
        mel_valid = jnp.logical_not(mel_masks).astype(jnp.float32)   # (B, T_mel)

        t_mel = mel_masks.shape[1]
        mel_targets = mel_targets[:, :t_mel, :]
        mel_predictions = mel_predictions[:, :t_mel, :]
        epsilon_denoise_prediction = epsilon_denoise_prediction[:, :t_mel, :]

        b, tm, n_mels = mel_targets.shape
        rows = b * tm
        # No dtype upcast here: bf16 stays bf16 in HBM, cast per-tile in the kernel.
        mel_tgt2d = mel_targets.reshape(rows, n_mels)
        mel_pred2d = mel_predictions.reshape(rows, n_mels)
        eps_pred2d = epsilon_denoise_prediction.reshape(rows, n_mels)

        # ---- tiling / grid geometry -------------------------------------------------
        tile_r = self.tile_rows if rows >= self.tile_rows else _round_up(rows, 8)
        nb = -(-rows // tile_r)                   # number of real row tiles
        n_splits = self.num_splits
        tpc = -(-nb // n_splits)                  # tiles per split
        total_tiles = n_splits * tpc
        rows_padded = total_tiles * tile_r

        # Per-row validity mask, zero-padded to the full grid extent (only `rows` f32
        # of real HBM data); per-tile block is (tile_r, 1), broadcast over lanes.
        mask_flat = mel_valid.reshape(rows)
        mel_mask_col = jnp.pad(mask_flat, (0, rows_padded - rows)).reshape(rows_padded, 1)

        pitch_mask = src_valid if self.pitch_feature_level == "phoneme_level" else mel_valid
        energy_mask = src_valid if self.energy_feature_level == "phoneme_level" else mel_valid

        def mel_index_map(c, i):
            # Clamp so overflow steps (when total_tiles > nb) re-read the last real
            # block; their contribution is zero because the mask tile there is zero.
            return (jnp.minimum(c * tpc + i, nb - 1), 0)

        def mask_index_map(c, i):
            return (c * tpc + i, 0)               # mask array covers the full grid extent

        def resident(arr):
            # Small tensors: one block = the whole array, DMA'd once per core.
            return pl.BlockSpec(arr.shape, lambda c, i: (0, 0))

        grid = (n_splits, tpc)

        out_shape = (
            jax.ShapeDtypeStruct((n_splits, 1, n_mels), jnp.float32),  # mel |.| lane sums
            jax.ShapeDtypeStruct((n_splits, 1, n_mels), jnp.float32),  # postnet lane sums
            jax.ShapeDtypeStruct((n_splits, 1, 8), jnp.float32),       # pitch/energy/dur sq sums
        )
        out_specs = (
            pl.BlockSpec((1, 1, n_mels), lambda c, i: (c, 0, 0)),
            pl.BlockSpec((1, 1, n_mels), lambda c, i: (c, 0, 0)),
            pl.BlockSpec((1, 1, 8), lambda c, i: (c, 0, 0)),
        )
        in_specs = [
            pl.BlockSpec((tile_r, n_mels), mel_index_map),   # mel targets
            pl.BlockSpec((tile_r, n_mels), mel_index_map),   # mel predictions
            pl.BlockSpec((tile_r, n_mels), mel_index_map),   # epsilon / postnet predictions
            pl.BlockSpec((tile_r, 1), mask_index_map),       # per-row mel mask (zero-padded)
            resident(pitch_targets),
            resident(pitch_predictions),
            resident(pitch_mask),
            resident(energy_targets),
            resident(energy_predictions),
            resident(energy_mask),
            resident(duration_targets),
            resident(log_duration_predictions),
            resident(src_valid),
        ]

        mel_sums, eps_sums, small_sums = pl.pallas_call(
            _fastspeech2_loss_kernel,
            out_shape=out_shape,
            grid_spec=pltpu.PrefetchScalarGridSpec(
                num_scalar_prefetch=0,
                grid=grid,
                in_specs=in_specs,
                out_specs=out_specs,
            ),
            compiler_params=pltpu.CompilerParams(
                dimension_semantics=("parallel", "arbitrary"),
                vmem_limit_bytes=32 * 1024 * 1024,
            ),
        )(
            mel_tgt2d, mel_pred2d, eps_pred2d, mel_mask_col,
            pitch_targets, pitch_predictions, pitch_mask,
            energy_targets, energy_predictions, energy_mask,
            duration_targets, log_duration_predictions, src_valid,
        )

        # ---- tiny epilogue in plain JAX: combine splits, divide by valid counts -----
        mel_abs_sum = jnp.sum(mel_sums)
        eps_abs_sum = jnp.sum(eps_sums)
        small = jnp.sum(small_sums, axis=(0, 1))        # (8,)
        pitch_sq, energy_sq, dur_sq = small[0], small[1], small[2]

        # Denominators from the (tiny) masks — replaces in-kernel mask count reductions.
        # NOTE: all-padding masks give a 0 denominator -> NaN, same as PyTorch
        # masked_select + mean on an empty selection.
        n_mel_elems = jnp.sum(mel_valid) * n_mels
        n_pitch = jnp.sum(pitch_mask)
        n_energy = jnp.sum(energy_mask)
        n_src = jnp.sum(src_valid)

        mel_loss = mel_abs_sum / n_mel_elems
        postnet_mel_loss = eps_abs_sum / n_mel_elems
        pitch_loss = pitch_sq / n_pitch
        energy_loss = energy_sq / n_energy
        duration_loss = dur_sq / n_src

        total_loss = mel_loss + postnet_mel_loss + duration_loss + pitch_loss + energy_loss
        return [total_loss, mel_loss, postnet_mel_loss, pitch_loss, energy_loss, duration_loss]


def _reference_loss(inputs, predictions, pitch_level, energy_level):
    """Pure-JAX reference replicating the PyTorch masked_select + mean semantics."""
    mel_t, _, _, pitch_t, energy_t, dur_t = inputs[6:]
    (mel_p, eps_p, pitch_p, energy_p, logdur_p, _, src_m, mel_m, _, _) = predictions
    src_v = jnp.logical_not(src_m)
    mel_v = jnp.logical_not(mel_m)
    logdur_t = jnp.log(dur_t.astype(jnp.float32) + 1.0)

    def masked_mean(fn, pred, tgt, mask):
        m = mask.astype(jnp.float32)
        while m.ndim < pred.ndim:
            m = m[..., None]
        num = jnp.sum(fn(pred.astype(jnp.float32) - tgt.astype(jnp.float32)) * m)
        den = jnp.sum(m) * (pred.size / mask.size if pred.ndim > mask.ndim else 1.0)
        return num / den

    l1 = lambda d: jnp.abs(d)
    l2 = lambda d: d * d
    mel_loss = masked_mean(l1, mel_p, mel_t, mel_v)
    post_loss = masked_mean(l1, eps_p, mel_t, mel_v)
    pm = src_v if pitch_level == "phoneme_level" else mel_v
    em = src_v if energy_level == "phoneme_level" else mel_v
    pitch_loss = masked_mean(l2, pitch_p, pitch_t, pm)
    energy_loss = masked_mean(l2, energy_p, energy_t, em)
    dur_loss = masked_mean(l2, logdur_p, logdur_t, src_v)
    total = mel_loss + post_loss + dur_loss + pitch_loss + energy_loss
    return [total, mel_loss, post_loss, pitch_loss, energy_loss, dur_loss]


if __name__ == "__main__":
    key = jax.random.PRNGKey(0)
    B, T_SRC, T_MEL, N_MELS = 2, 8, 20, 32

    ks = jax.random.split(key, 10)

    # Targets (inputs[6:]):
    mel_targets = jax.random.normal(ks[0], (B, T_MEL, N_MELS), jnp.float32)
    pitch_targets = jax.random.normal(ks[1], (B, T_SRC), jnp.float32)
    energy_targets = jax.random.normal(ks[2], (B, T_SRC), jnp.float32)
    duration_targets = jax.random.randint(ks[3], (B, T_SRC), 0, 6).astype(jnp.int32)

    # Predictions:
    mel_predictions = jax.random.normal(ks[4], (B, T_MEL, N_MELS), jnp.float32)
    epsilon_denoise_prediction = jax.random.normal(ks[5], (B, T_MEL, N_MELS), jnp.float32)
    pitch_predictions = jax.random.normal(ks[6], (B, T_SRC), jnp.float32)
    energy_predictions = jax.random.normal(ks[7], (B, T_SRC), jnp.float32)
    log_duration_predictions = jax.random.normal(ks[8], (B, T_SRC), jnp.float32)

    # Padding masks (True = pad), built from per-example lengths.
    src_lens = jnp.array([8, 5], jnp.int32)
    mel_lens = jnp.array([20, 13], jnp.int32)
    src_masks = jnp.arange(T_SRC)[None, :] >= src_lens[:, None]   # (B, T_src) bool
    mel_masks = jnp.arange(T_MEL)[None, :] >= mel_lens[:, None]   # (B, T_mel) bool

    # inputs[0:6] are unused by the loss forward; placeholders only.
    inputs = (None, None, None, None, None, None,
              mel_targets, None, None, pitch_targets, energy_targets, duration_targets)
    predictions = (mel_predictions, epsilon_denoise_prediction, pitch_predictions,
                   energy_predictions, log_duration_predictions, None,
                   src_masks, mel_masks, None, None)

    preprocess_config = {
        "preprocessing": {
            "pitch": {"feature": "phoneme_level"},
            "energy": {"feature": "phoneme_level"},
        }
    }
    model_config = {}

    ref = _reference_loss(inputs, predictions, "phoneme_level", "phoneme_level")

    # Config 1: default tiling (whole 40-row range fits one tile per split).
    loss_default = FastSpeech2LossPallas(preprocess_config, model_config)
    # Config 2: tiny tiles to exercise multi-step accumulation, the partial last
    # block and the clamped duplicate-block path at small scale.
    loss_tiled = FastSpeech2LossPallas(preprocess_config, model_config, tile_rows=16)

    for loss_mod in (loss_default, loss_tiled):
        losses = loss_mod(inputs, predictions)
        losses = [jax.block_until_ready(l) for l in losses]
        for got, want in zip(losses, ref):
            assert jnp.allclose(got, want, rtol=1e-5, atol=1e-5), (got, want)

    print("KERNEL_OK")
</pallas_src>

<mosaic_0001>
module attributes {stable_mosaic.version = 11 : i64} {
  func.func @_fastspeech2_loss_kernel(%arg0: i32, %arg1: i32, %arg2: memref<40x32xf32, #tpu.memory_space<vmem>>, %arg3: memref<40x32xf32, #tpu.memory_space<vmem>>, %arg4: memref<40x32xf32, #tpu.memory_space<vmem>>, %arg5: memref<40x1xf32, #tpu.memory_space<vmem>>, %arg6: memref<2x8xf32, #tpu.memory_space<vmem>>, %arg7: memref<2x8xf32, #tpu.memory_space<vmem>>, %arg8: memref<2x8xf32, #tpu.memory_space<vmem>>, %arg9: memref<2x8xf32, #tpu.memory_space<vmem>>, %arg10: memref<2x8xf32, #tpu.memory_space<vmem>>, %arg11: memref<2x8xf32, #tpu.memory_space<vmem>>, %arg12: memref<2x8xi32, #tpu.memory_space<vmem>>, %arg13: memref<2x8xf32, #tpu.memory_space<vmem>>, %arg14: memref<2x8xf32, #tpu.memory_space<vmem>>, %arg15: memref<1x1x32xf32, #tpu.memory_space<vmem>>, %arg16: memref<1x1x32xf32, #tpu.memory_space<vmem>>, %arg17: memref<1x1x8xf32, #tpu.memory_space<vmem>>) attributes {dimension_semantics = [#tpu.dimension_semantics<parallel>, #tpu.dimension_semantics<arbitrary>], iteration_bounds = array<i64: 2, 1>, scalar_prefetch = 0 : i64, scratch_operands = 0 : i64, tpu.core_type = #tpu.core_type<tc>, window_params = [{transform_indices = @transform_0, window_bounds = array<i64: 40, 32>}, {transform_indices = @transform_1, window_bounds = array<i64: 40, 32>}, {transform_indices = @transform_2, window_bounds = array<i64: 40, 32>}, {transform_indices = @transform_3, window_bounds = array<i64: 40, 1>}, {pipeline_mode = #tpu.pipeline_mode<synchronous>, transform_indices = @transform_4, window_bounds = array<i64: 2, 8>}, {pipeline_mode = #tpu.pipeline_mode<synchronous>, transform_indices = @transform_5, window_bounds = array<i64: 2, 8>}, {pipeline_mode = #tpu.pipeline_mode<synchronous>, transform_indices = @transform_6, window_bounds = array<i64: 2, 8>}, {pipeline_mode = #tpu.pipeline_mode<synchronous>, transform_indices = @transform_7, window_bounds = array<i64: 2, 8>}, {pipeline_mode = #tpu.pipeline_mode<synchronous>, transform_indices = @transform_8, window_bounds = array<i64: 2, 8>}, {pipeline_mode = #tpu.pipeline_mode<synchronous>, transform_indices = @transform_9, window_bounds = array<i64: 2, 8>}, {pipeline_mode = #tpu.pipeline_mode<synchronous>, transform_indices = @transform_10, window_bounds = array<i64: 2, 8>}, {pipeline_mode = #tpu.pipeline_mode<synchronous>, transform_indices = @transform_11, window_bounds = array<i64: 2, 8>}, {pipeline_mode = #tpu.pipeline_mode<synchronous>, transform_indices = @transform_12, window_bounds = array<i64: 2, 8>}, {transform_indices = @transform_13, window_bounds = array<i64: 1, 1, 32>}, {transform_indices = @transform_14, window_bounds = array<i64: 1, 1, 32>}, {transform_indices = @transform_15, window_bounds = array<i64: 1, 1, 8>}]} {
    %c0_i32 = arith.constant 0 : i32
    %0 = arith.cmpi eq, %arg1, %c0_i32 : i32
    %1 = arith.extui %0 : i1 to i32
    %c0_i32_0 = arith.constant 0 : i32
    %2 = arith.cmpi ne, %1, %c0_i32_0 : i32
    scf.if %2 {
      %cst_24 = arith.constant 0.000000e+00 : f32
      %33 = vector.broadcast %cst_24 : f32 to vector<1x1x32xf32>
      %c0_25 = arith.constant 0 : index
      %c0_26 = arith.constant 0 : index
      %c0_27 = arith.constant 0 : index
      %34 = vector.load %arg15[%c0_25, %c0_26, %c0_27] : memref<1x1x32xf32, #tpu.memory_space<vmem>>, vector<1x1x32xf32>
      tpu.vector_store %arg15[%c0_25, %c0_26, %c0_27], %33 {strides = array<i32>} : memref<1x1x32xf32, #tpu.memory_space<vmem>>, vector<1x1x32xf32>,
      %cst_28 = arith.constant 0.000000e+00 : f32
      %35 = vector.broadcast %cst_28 : f32 to vector<1x1x32xf32>
      %c0_29 = arith.constant 0 : index
      %c0_30 = arith.constant 0 : index
      %c0_31 = arith.constant 0 : index
      %36 = vector.load %arg16[%c0_29, %c0_30, %c0_31] : memref<1x1x32xf32, #tpu.memory_space<vmem>>, vector<1x1x32xf32>
      tpu.vector_store %arg16[%c0_29, %c0_30, %c0_31], %35 {strides = array<i32>} : memref<1x1x32xf32, #tpu.memory_space<vmem>>, vector<1x1x32xf32>,
      %c0_32 = arith.constant 0 : index
      %c0_33 = arith.constant 0 : index
      %37 = vector.load %arg7[%c0_32, %c0_33] : memref<2x8xf32, #tpu.memory_space<vmem>>, vector<2x8xf32>
      %c0_34 = arith.constant 0 : index
      %c0_35 = arith.constant 0 : index
      %38 = vector.load %arg6[%c0_34, %c0_35] : memref<2x8xf32, #tpu.memory_space<vmem>>, vector<2x8xf32>
      %39 = arith.subf %37, %38 : vector<2x8xf32>
      %c0_36 = arith.constant 0 : index
      %c0_37 = arith.constant 0 : index
      %40 = vector.load %arg10[%c0_36, %c0_37] : memref<2x8xf32, #tpu.memory_space<vmem>>, vector<2x8xf32>
      %c0_38 = arith.constant 0 : index
      %c0_39 = arith.constant 0 : index
      %41 = vector.load %arg9[%c0_38, %c0_39] : memref<2x8xf32, #tpu.memory_space<vmem>>, vector<2x8xf32>
      %42 = arith.subf %40, %41 : vector<2x8xf32>
      %c0_40 = arith.constant 0 : index
      %c0_41 = arith.constant 0 : index
      %43 = vector.load %arg12[%c0_40, %c0_41] : memref<2x8xi32, #tpu.memory_space<vmem>>, vector<2x8xi32>
      %44 = arith.sitofp %43 : vector<2x8xi32> to vector<2x8xf32>
      %cst_42 = arith.constant 1.000000e+00 : f32
      %45 = vector.broadcast %cst_42 : f32 to vector<2x8xf32>
      %46 = arith.addf %44, %45 : vector<2x8xf32>
      %47 = math.log %46 : vector<2x8xf32>
      %c0_43 = arith.constant 0 : index
      %c0_44 = arith.constant 0 : index
      %48 = vector.load %arg13[%c0_43, %c0_44] : memref<2x8xf32, #tpu.memory_space<vmem>>, vector<2x8xf32>
      %49 = arith.subf %48, %47 : vector<2x8xf32>
      %50 = arith.mulf %39, %39 : vector<2x8xf32>
      %c0_45 = arith.constant 0 : index
      %c0_46 = arith.constant 0 : index
      %51 = vector.load %arg8[%c0_45, %c0_46] : memref<2x8xf32, #tpu.memory_space<vmem>>, vector<2x8xf32>
      %52 = arith.mulf %50, %51 : vector<2x8xf32>
      %cst_47 = arith.constant dense<0.000000e+00> : vector<2xf32>
      %53 = vector.multi_reduction <add>, %52, %cst_47 [1] : vector<2x8xf32> to vector<2xf32>
      %54 = vector.shape_cast %53 : vector<2xf32> to vector<2x1xf32>
      %cst_48 = arith.constant dense<0.000000e+00> : vector<1xf32>
      %55 = vector.multi_reduction <add>, %54, %cst_48 [0] : vector<2x1xf32> to vector<1xf32>
      %56 = vector.shape_cast %55 : vector<1xf32> to vector<1x1xf32>
      %57 = arith.mulf %42, %42 : vector<2x8xf32>
      %c0_49 = arith.constant 0 : index
      %c0_50 = arith.constant 0 : index
      %58 = vector.load %arg11[%c0_49, %c0_50] : memref<2x8xf32, #tpu.memory_space<vmem>>, vector<2x8xf32>
      %59 = arith.mulf %57, %58 : vector<2x8xf32>
      %cst_51 = arith.constant dense<0.000000e+00> : vector<2xf32>
      %60 = vector.multi_reduction <add>, %59, %cst_51 [1] : vector<2x8xf32> to vector<2xf32>
      %61 = vector.shape_cast %60 : vector<2xf32> to vector<2x1xf32>
      %cst_52 = arith.constant dense<0.000000e+00> : vector<1xf32>
      %62 = vector.multi_reduction <add>, %61, %cst_52 [0] : vector<2x1xf32> to vector<1xf32>
      %63 = vector.shape_cast %62 : vector<1xf32> to vector<1x1xf32>
      %64 = arith.mulf %49, %49 : vector<2x8xf32>
      %c0_53 = arith.constant 0 : index
      %c0_54 = arith.constant 0 : index
      %65 = vector.load %arg14[%c0_53, %c0_54] : memref<2x8xf32, #tpu.memory_space<vmem>>, vector<2x8xf32>
      %66 = arith.mulf %64, %65 : vector<2x8xf32>
      %cst_55 = arith.constant dense<0.000000e+00> : vector<2xf32>
      %67 = vector.multi_reduction <add>, %66, %cst_55 [1] : vector<2x8xf32> to vector<2xf32>
      %68 = vector.shape_cast %67 : vector<2xf32> to vector<2x1xf32>
      %cst_56 = arith.constant dense<0.000000e+00> : vector<1xf32>
      %69 = vector.multi_reduction <add>, %68, %cst_56 [0] : vector<2x1xf32> to vector<1xf32>
      %70 = vector.shape_cast %69 : vector<1xf32> to vector<1x1xf32>
      %c0_i32_57 = arith.constant 0 : i32
      %71 = arith.cmpi eq, %arg0, %c0_i32_57 : i32
      %cst_58 = arith.constant 1.000000e+00 : f32
      %cst_59 = arith.constant 0.000000e+00 : f32
      %72 = arith.select %71, %cst_58, %cst_59 : f32
      %cst_60 = arith.constant 0.000000e+00 : f32
      %73 = vector.broadcast %cst_60 : f32 to vector<1x5xf32>
      %74 = tpu.concatenate %56, %63, %70, %73 in 1 : vector<1x1xf32>, vector<1x1xf32>, vector<1x1xf32>, vector<1x5xf32> -> vector<1x8xf32>
      %75 = vector.broadcast %72 : f32 to vector<1x8xf32>
      %76 = arith.mulf %74, %75 : vector<1x8xf32>
      %77 = vector.shape_cast %76 : vector<1x8xf32> to vector<1x1x8xf32>
      %c0_61 = arith.constant 0 : index
      %c0_62 = arith.constant 0 : index
      %c0_63 = arith.constant 0 : index
      %78 = vector.load %arg17[%c0_61, %c0_62, %c0_63] : memref<1x1x8xf32, #tpu.memory_space<vmem>>, vector<1x1x8xf32>
      tpu.vector_store %arg17[%c0_61, %c0_62, %c0_63], %77 {strides = array<i32>} : memref<1x1x8xf32, #tpu.memory_space<vmem>>, vector<1x1x8xf32>,
    } else {
    }
    %c0 = arith.constant 0 : index
    %c0_1 = arith.constant 0 : index
    %3 = vector.load %arg5[%c0, %c0_1] : memref<40x1xf32, #tpu.memory_space<vmem>>, vector<40x1xf32>
    %cst = arith.constant 5.000000e-01 : f32
    %4 = vector.broadcast %cst : f32 to vector<40x1xf32>
    %5 = arith.cmpf ogt, %3, %4 : vector<40x1xf32>
    %c0_2 = arith.constant 0 : index
    %c0_3 = arith.constant 0 : index
    %6 = vector.load %arg2[%c0_2, %c0_3] : memref<40x32xf32, #tpu.memory_space<vmem>>, vector<40x32xf32>
    %c0_4 = arith.constant 0 : index
    %c0_5 = arith.constant 0 : index
    %7 = vector.load %arg3[%c0_4, %c0_5] : memref<40x32xf32, #tpu.memory_space<vmem>>, vector<40x32xf32>
    %8 = arith.subf %7, %6 : vector<40x32xf32>
    %9 = math.absf %8 : vector<40x32xf32>
    %cst_6 = arith.constant 0.000000e+00 : f32
    %10 = vector.shape_cast %5 : vector<40x1xi1> to vector<40x1xi1>
    %11 = vector.broadcast %10 : vector<40x1xi1> to vector<40x32xi1>
    %12 = vector.broadcast %cst_6 : f32 to vector<40x32xf32>
    %13 = arith.select %11, %9, %12 : vector<40x32xi1>, vector<40x32xf32>
    %c0_7 = arith.constant 0 : index
    %c0_8 = arith.constant 0 : index
    %14 = vector.load %arg4[%c0_7, %c0_8] : memref<40x32xf32, #tpu.memory_space<vmem>>, vector<40x32xf32>
    %15 = arith.subf %14, %6 : vector<40x32xf32>
    %16 = math.absf %15 : vector<40x32xf32>
    %cst_9 = arith.constant 0.000000e+00 : f32
    %17 = vector.shape_cast %5 : vector<40x1xi1> to vector<40x1xi1>
    %18 = vector.broadcast %17 : vector<40x1xi1> to vector<40x32xi1>
    %19 = vector.broadcast %cst_9 : f32 to vector<40x32xf32>
    %20 = arith.select %18, %16, %19 : vector<40x32xi1>, vector<40x32xf32>
    %c0_10 = arith.constant 0 : index
    %c0_11 = arith.constant 0 : index
    %c0_12 = arith.constant 0 : index
    %21 = vector.load %arg15[%c0_10, %c0_11, %c0_12] : memref<1x1x32xf32, #tpu.memory_space<vmem>>, vector<1x1x32xf32>
    %cst_13 = arith.constant dense<0.000000e+00> : vector<32xf32>
    %22 = vector.multi_reduction <add>, %13, %cst_13 [0] : vector<40x32xf32> to vector<32xf32>
    %23 = vector.shape_cast %22 : vector<32xf32> to vector<1x32xf32>
    %24 = vector.shape_cast %23 : vector<1x32xf32> to vector<1x1x32xf32>
    %25 = arith.addf %21, %24 : vector<1x1x32xf32>
    %c0_14 = arith.constant 0 : index
    %c0_15 = arith.constant 0 : index
    %c0_16 = arith.constant 0 : index
    %26 = vector.load %arg15[%c0_14, %c0_15, %c0_16] : memref<1x1x32xf32, #tpu.memory_space<vmem>>, vector<1x1x32xf32>
    tpu.vector_store %arg15[%c0_14, %c0_15, %c0_16], %25 {strides = array<i32>} : memref<1x1x32xf32, #tpu.memory_space<vmem>>, vector<1x1x32xf32>,
    %c0_17 = arith.constant 0 : index
    %c0_18 = arith.constant 0 : index
    %c0_19 = arith.constant 0 : index
    %27 = vector.load %arg16[%c0_17, %c0_18, %c0_19] : memref<1x1x32xf32, #tpu.memory_space<vmem>>, vector<1x1x32xf32>
    %cst_20 = arith.constant dense<0.000000e+00> : vector<32xf32>
    %28 = vector.multi_reduction <add>, %20, %cst_20 [0] : vector<40x32xf32> to vector<32xf32>
    %29 = vector.shape_cast %28 : vector<32xf32> to vector<1x32xf32>
    %30 = vector.shape_cast %29 : vector<1x32xf32> to vector<1x1x32xf32>
    %31 = arith.addf %27, %30 : vector<1x1x32xf32>
    %c0_21 = arith.constant 0 : index
    %c0_22 = arith.constant 0 : index
    %c0_23 = arith.constant 0 : index
    %32 = vector.load %arg16[%c0_21, %c0_22, %c0_23] : memref<1x1x32xf32, #tpu.memory_space<vmem>>, vector<1x1x32xf32>
    tpu.vector_store %arg16[%c0_21, %c0_22, %c0_23], %31 {strides = array<i32>} : memref<1x1x32xf32, #tpu.memory_space<vmem>>, vector<1x1x32xf32>,
    return
  }
  func.func @transform_0(%arg0: i32, %arg1: i32) -> (i32, i32) {
    %c1_i32 = arith.constant 1 : i32
    %0 = arith.muli %arg0, %c1_i32 : i32
    %1 = arith.addi %0, %arg1 : i32
    %c0_i32 = arith.constant 0 : i32
    %2 = arith.minsi %1, %c0_i32 : i32
    %c0_i32_0 = arith.constant 0 : i32
    %c0_i32_1 = arith.constant 0 : i32
    return %2, %c0_i32_0 : i32, i32
  }
  func.func @transform_1(%arg0: i32, %arg1: i32) -> (i32, i32) {
    %c1_i32 = arith.constant 1 : i32
    %0 = arith.muli %arg0, %c1_i32 : i32
    %1 = arith.addi %0, %arg1 : i32
    %c0_i32 = arith.constant 0 : i32
    %2 = arith.minsi %1, %c0_i32 : i32
    %c0_i32_0 = arith.constant 0 : i32
    %c0_i32_1 = arith.constant 0 : i32
    return %2, %c0_i32_0 : i32, i32
  }
  func.func @transform_2(%arg0: i32, %arg1: i32) -> (i32, i32) {
    %c1_i32 = arith.constant 1 : i32
    %0 = arith.muli %arg0, %c1_i32 : i32
    %1 = arith.addi %0, %arg1 : i32
    %c0_i32 = arith.constant 0 : i32
    %2 = arith.minsi %1, %c0_i32 : i32
    %c0_i32_0 = arith.constant 0 : i32
    %c0_i32_1 = arith.constant 0 : i32
    return %2, %c0_i32_0 : i32, i32
  }
  func.func @transform_3(%arg0: i32, %arg1: i32) -> (i32, i32) {
    %c1_i32 = arith.constant 1 : i32
    %0 = arith.muli %arg0, %c1_i32 : i32
    %1 = arith.addi %0, %arg1 : i32
    %c0_i32 = arith.constant 0 : i32
    %c0_i32_0 = arith.constant 0 : i32
    return %1, %c0_i32 : i32, i32
  }
  func.func @transform_4(%arg0: i32, %arg1: i32) -> (i32, i32) {
    %c0_i32 = arith.constant 0 : i32
    %c0_i32_0 = arith.constant 0 : i32
    %c0_i32_1 = arith.constant 0 : i32
    return %c0_i32, %c0_i32_0 : i32, i32
  }
  func.func @transform_5(%arg0: i32, %arg1: i32) -> (i32, i32) {
    %c0_i32 = arith.constant 0 : i32
    %c0_i32_0 = arith.constant 0 : i32
    %c0_i32_1 = arith.constant 0 : i32
    return %c0_i32, %c0_i32_0 : i32, i32
  }
  func.func @transform_6(%arg0: i32, %arg1: i32) -> (i32, i32) {
    %c0_i32 = arith.constant 0 : i32
    %c0_i32_0 = arith.constant 0 : i32
    %c0_i32_1 = arith.constant 0 : i32
    return %c0_i32, %c0_i32_0 : i32, i32
  }
  func.func @transform_7(%arg0: i32, %arg1: i32) -> (i32, i32) {
    %c0_i32 = arith.constant 0 : i32
    %c0_i32_0 = arith.constant 0 : i32
    %c0_i32_1 = arith.constant 0 : i32
    return %c0_i32, %c0_i32_0 : i32, i32
  }
  func.func @transform_8(%arg0: i32, %arg1: i32) -> (i32, i32) {
    %c0_i32 = arith.constant 0 : i32
    %c0_i32_0 = arith.constant 0 : i32
    %c0_i32_1 = arith.constant 0 : i32
    return %c0_i32, %c0_i32_0 : i32, i32
  }
  func.func @transform_9(%arg0: i32, %arg1: i32) -> (i32, i32) {
    %c0_i32 = arith.constant 0 : i32
    %c0_i32_0 = arith.constant 0 : i32
    %c0_i32_1 = arith.constant 0 : i32
    return %c0_i32, %c0_i32_0 : i32, i32
  }
  func.func @transform_10(%arg0: i32, %arg1: i32) -> (i32, i32) {
    %c0_i32 = arith.constant 0 : i32
    %c0_i32_0 = arith.constant 0 : i32
    %c0_i32_1 = arith.constant 0 : i32
    return %c0_i32, %c0_i32_0 : i32, i32
  }
  func.func @transform_11(%arg0: i32, %arg1: i32) -> (i32, i32) {
    %c0_i32 = arith.constant 0 : i32
    %c0_i32_0 = arith.constant 0 : i32
    %c0_i32_1 = arith.constant 0 : i32
    return %c0_i32, %c0_i32_0 : i32, i32
  }
  func.func @transform_12(%arg0: i32, %arg1: i32) -> (i32, i32) {
    %c0_i32 = arith.constant 0 : i32
    %c0_i32_0 = arith.constant 0 : i32
    %c0_i32_1 = arith.constant 0 : i32
    return %c0_i32, %c0_i32_0 : i32, i32
  }
  func.func @transform_13(%arg0: i32, %arg1: i32) -> (i32, i32, i32) {
    %c0_i32 = arith.constant 0 : i32
    %c0_i32_0 = arith.constant 0 : i32
    %c0_i32_1 = arith.constant 0 : i32
    return %arg0, %c0_i32, %c0_i32_0 : i32, i32, i32
  }
  func.func @transform_14(%arg0: i32, %arg1: i32) -> (i32, i32, i32) {
    %c0_i32 = arith.constant 0 : i32
    %c0_i32_0 = arith.constant 0 : i32
    %c0_i32_1 = arith.constant 0 : i32
    return %arg0, %c0_i32, %c0_i32_0 : i32, i32, i32
  }
  func.func @transform_15(%arg0: i32, %arg1: i32) -> (i32, i32, i32) {
    %c0_i32 = arith.constant 0 : i32
    %c0_i32_0 = arith.constant 0 : i32
    %c0_i32_1 = arith.constant 0 : i32
    return %arg0, %c0_i32, %c0_i32_0 : i32, i32, i32
  }
}

</mosaic_0001>

<llo_original>
// kernel: tpu_custom_call.1
$region0: #{tpu_custom_call.1}
  #allocation0 [shape = 'u32[]', space=smem, size = 0x4, offset = 0x4, fixed_abs, tag = 'smem constant byte address 0x4 - core index']
  #allocation1 [shape = 'u32[144,128]{1,0:T(1,128)}', space=vmem, size = 0x12000, scoped, tag = 'internal scratch']
  %s0 = inlined_call_operand.vmem [shape: f32[40,32], index: 0, kind: input, shape index: {}]
  %s1 = inlined_call_operand.vmem [shape: f32[40,32], index: 1, kind: input, shape index: {}]
  %s2 = inlined_call_operand.vmem [shape: f32[40,32], index: 2, kind: input, shape index: {}]
  %s3 = inlined_call_operand.vmem [shape: f32[80,1], index: 3, kind: input, shape index: {}]
  %s4 = inlined_call_operand.vmem [shape: f32[2,8], index: 4, kind: input, shape index: {}]
  %s5 = inlined_call_operand.vmem [shape: f32[2,8], index: 5, kind: input, shape index: {}]
  %s6 = inlined_call_operand.vmem [shape: f32[2,8], index: 6, kind: input, shape index: {}]
  %s7 = inlined_call_operand.vmem [shape: f32[2,8], index: 7, kind: input, shape index: {}]
  %s8 = inlined_call_operand.vmem [shape: f32[2,8], index: 8, kind: input, shape index: {}]
  %s9 = inlined_call_operand.vmem [shape: f32[2,8], index: 9, kind: input, shape index: {}]
  %s10 = inlined_call_operand.vmem [shape: s32[2,8], index: 10, kind: input, shape index: {}]
  %s11 = inlined_call_operand.vmem [shape: f32[2,8], index: 11, kind: input, shape index: {}]
  %s12 = inlined_call_operand.vmem [shape: f32[2,8], index: 12, kind: input, shape index: {}]
  %s13 = inlined_call_operand.hbm [shape: f32[2,1,32], index: 13, kind: output, shape index: {0}]
  %s14 = inlined_call_operand.hbm [shape: f32[2,1,32], index: 14, kind: output, shape index: {1}]
  %s15 = inlined_call_operand.hbm [shape: f32[2,1,8], index: 15, kind: output, shape index: {2}]
  %16 = xla_tuple %s13, %s14, %s15
  %s17 = sld [smem:[#allocation0]]
  $region105: #{tpu_custom_call.1} parent=0
    _
  %s19 = ssub.s32 1, %s17
  %s20 = scalar_select 0, %s19, %s17
  $region1: #{tpu_custom_call.1} parent=0
    #allocation2 [shape = 'u8[1024]{0}', space=vmem, size = 0x400, scoped, tag = 'output window, operand 0']
    #allocation3 [shape = 's32[2]{0}', space=sflag, size = 0x8, scoped, tag = 'scoped memory for tpu_custom_call.1']
    #allocation4 [shape = 'u8[1024]{0}', space=vmem, size = 0x400, scoped, tag = 'output window, operand 1']
    #allocation5 [shape = 's32[2]{0}', space=sflag, size = 0x8, scoped, tag = 'scoped memory for tpu_custom_call.1']
    #allocation6 [shape = 'u8[1024]{0}', space=vmem, size = 0x400, scoped, tag = 'output window, operand 2']
    %21 = vsyncpa [#allocation3], 0
    %s22 = scalar_lea.sflag [#allocation3], 1
    %23 = vsyncpa %s22, 0
    %24 = vsyncpa [#allocation5], 0
    %s25 = scalar_lea.sflag [#allocation5], 1
    %26 = vsyncpa %s25, 0
    loop: start=0, step=1, limit=4
    $region2: #{tpu_custom_call.1} parent=1 // loop_pre_header
      _
    $region3: #{tpu_custom_call.1} parent=1 // loop_header
      %s28 = sphi 0, %s32
      %p29 = scmp.ge.s32.totalorder %s28, 4
      %s35 = sphi 0, %s47
      %s36 = sphi 0, %s43
      %s37 = sphi 0, %s35
      %s38 = sphi 0, %s36
      %s39 = sphi 0, %s37
      %s40 = sphi 0, %s38
      %s56 = sphi 0, %s58
      %s59 = sphi 0, %s56
      %s60 = sphi 0, %s59
      %s76 = sphi 0, %s60
      %s88 = sphi 0, %s90
      %s91 = sphi 0, %s88
      %s92 = sphi 0, %s91
      %s108 = sphi 0, %s92
      %s120 = sphi 0, %s122
      %s123 = sphi 0, %s120
      %s124 = sphi 0, %s123
      %s140 = sphi 0, %s124
      %s148 = sphi 0, %s150
      %s151 = sphi 0, %s148
      %s152 = sphi 0, %s151
      %s168 = sphi 0, %s152
      %s172 = sphi 0, %s172
      %s174 = sphi 0, %s172
      %s175 = sphi 0, %s174
      %s189 = sphi 0, %s175
      %s193 = sphi 0, %s193
      %s195 = sphi 0, %s193
      %s196 = sphi 0, %s195
      %s210 = sphi 0, %s196
      %s214 = sphi 0, %s214
      %s216 = sphi 0, %s214
      %s217 = sphi 0, %s216
      %s231 = sphi 0, %s217
      %s235 = sphi 0, %s235
      %s237 = sphi 0, %s235
      %s238 = sphi 0, %s237
      %s252 = sphi 0, %s238
      %s256 = sphi 0, %s256
      %s258 = sphi 0, %s256
      %s259 = sphi 0, %s258
      %s273 = sphi 0, %s259
      %s277 = sphi 0, %s277
      %s279 = sphi 0, %s277
      %s280 = sphi 0, %s279
      %s294 = sphi 0, %s280
      %s298 = sphi 0, %s298
      %s300 = sphi 0, %s298
      %s301 = sphi 0, %s300
      %s315 = sphi 0, %s301
      %s319 = sphi 0, %s319
      %s321 = sphi 0, %s319
      %s322 = sphi 0, %s321
      %s336 = sphi 0, %s322
      %s340 = sphi 0, %s340
      %s342 = sphi 0, %s340
      %s343 = sphi 0, %s342
      %s357 = sphi 0, %s343
      %s363 = sphi 0, %s365
      %s366 = sphi 0, %s363
      %s367 = sphi 0, %s366
      %s383 = sphi 0, %s367
      %s389 = sphi 0, %s391
      %s392 = sphi 0, %s389
      %s393 = sphi 0, %s392
      %s409 = sphi 0, %s393
      %s415 = sphi 0, %s417
      %s418 = sphi 0, %s415
      %s419 = sphi 0, %s418
      %s435 = sphi 0, %s419
    $region4: #{tpu_custom_call.1} parent=1 // loop_header_branch
      %31 = sbr.rel (%p29) target = $region8
    $region5: #{tpu_custom_call.1} parent=1 // loop_body
      %s33 = ssub.s32 %s28, 1
      %s34 = ssub.s32 %s28, 2
      %s41 = sadd.s32 1, %s36
      %p42 = scmp.ge.s32.totalorder %s41, 1
      %s43 = scalar_select %p42, 0, %s41
      %s44 = sadd.s32 1, %s35
      %s45 = scalar_select %p42, %s44, %s35
      %p46 = scmp.ge.s32.totalorder %s45, 2
      %s47 = scalar_select %p46, 0, %s45
      %s48 = sadd.s32 %s35, %s36
      %p49 = scmp.lt.s32.totalorder %s48, 0
      %s50 = scalar_select %p49, %s48, 0
      %s51 = sadd.s32 %s47, %s43
      %p52 = scmp.lt.s32.totalorder %s51, 0
      %s53 = scalar_select %p52, %s51, 0
      %s54 = ssub.s32 %s50, %s53
      %p55 = scmp.eq.s32.totalorder %s54, 0
      %s57 = sadd.s32 %s56, 1
      %s58 = scalar_select %p55, %s56, %s57
      %p61 = pneg %p55
      %p62 = scmp.eq.s32.totalorder %s28, 1
      %p63 = por %p61, %p62
      %p64 = scmp.ne.s32.totalorder %s56, %s59
      %p65 = scmp.eq.s32.totalorder %s28, 0
      %p66 = por %p64, %p65
      %p67 = scmp.ne.s32.totalorder %s56, %s59
      %p68 = scmp.eq.s32.totalorder %s33, 1
      %p69 = por %p67, %p68
      %p70 = scmp.ne.s32.totalorder %s59, %s60
      %p71 = scmp.eq.s32.totalorder %s33, 0
      %p72 = por %p70, %p71
      %p73 = scmp.ne.s32.totalorder %s59, %s60
      %p74 = scmp.eq.s32.totalorder %s34, 1
      %p75 = por %p73, %p74
      %p77 = scmp.ne.s32.totalorder %s60, %s76
      %p78 = scmp.eq.s32.totalorder %s34, 0
      %p79 = por %p77, %p78
      %s80 = sadd.s32 %s35, %s36
      %p81 = scmp.lt.s32.totalorder %s80, 0
      %s82 = scalar_select %p81, %s80, 0
      %s83 = sadd.s32 %s47, %s43
      %p84 = scmp.lt.s32.totalorder %s83, 0
      %s85 = scalar_select %p84, %s83, 0
      %s86 = ssub.s32 %s82, %s85
      %p87 = scmp.eq.s32.totalorder %s86, 0
      %s89 = sadd.s32 %s88, 1
      %s90 = scalar_select %p87, %s88, %s89
      %p93 = pneg %p87
      %p94 = scmp.eq.s32.totalorder %s28, 1
      %p95 = por %p93, %p94
      %p96 = scmp.ne.s32.totalorder %s88, %s91
      %p97 = scmp.eq.s32.totalorder %s28, 0
      %p98 = por %p96, %p97
      %p99 = scmp.ne.s32.totalorder %s88, %s91
      %p100 = scmp.eq.s32.totalorder %s33, 1
      %p101 = por %p99, %p100
      %p102 = scmp.ne.s32.totalorder %s91, %s92
      %p103 = scmp.eq.s32.totalorder %s33, 0
      %p104 = por %p102, %p103
      %p105 = scmp.ne.s32.totalorder %s91, %s92
      %p106 = scmp.eq.s32.totalorder %s34, 1
      %p107 = por %p105, %p106
      %p109 = scmp.ne.s32.totalorder %s92, %s108
      %p110 = scmp.eq.s32.totalorder %s34, 0
      %p111 = por %p109, %p110
      %s112 = sadd.s32 %s35, %s36
      %p113 = scmp.lt.s32.totalorder %s112, 0
      %s114 = scalar_select %p113, %s112, 0
      %s115 = sadd.s32 %s47, %s43
      %p116 = scmp.lt.s32.totalorder %s115, 0
      %s117 = scalar_select %p116, %s115, 0
      %s118 = ssub.s32 %s114, %s117
      %p119 = scmp.eq.s32.totalorder %s118, 0
      %s121 = sadd.s32 %s120, 1
      %s122 = scalar_select %p119, %s120, %s121
      %p125 = pneg %p119
      %p126 = scmp.eq.s32.totalorder %s28, 1
      %p127 = por %p125, %p126
      %p128 = scmp.ne.s32.totalorder %s120, %s123
      %p129 = scmp.eq.s32.totalorder %s28, 0
      %p130 = por %p128, %p129
      %p131 = scmp.ne.s32.totalorder %s120, %s123
      %p132 = scmp.eq.s32.totalorder %s33, 1
      %p133 = por %p131, %p132
      %p134 = scmp.ne.s32.totalorder %s123, %s124
      %p135 = scmp.eq.s32.totalorder %s33, 0
      %p136 = por %p134, %p135
      %p137 = scmp.ne.s32.totalorder %s123, %s124
      %p138 = scmp.eq.s32.totalorder %s34, 1
      %p139 = por %p137, %p138
      %p141 = scmp.ne.s32.totalorder %s124, %s140
      %p142 = scmp.eq.s32.totalorder %s34, 0
      %p143 = por %p141, %p142
      %s144 = sadd.s32 %s35, %s36
      %s145 = sadd.s32 %s47, %s43
      %s146 = ssub.s32 %s144, %s145
      %p147 = scmp.eq.s32.totalorder %s146, 0
      %s149 = sadd.s32 %s148, 1
      %s150 = scalar_select %p147, %s148, %s149
      %p153 = pneg %p147
      %p154 = scmp.eq.s32.totalorder %s28, 1
      %p155 = por %p153, %p154
      %p156 = scmp.ne.s32.totalorder %s148, %s151
      %p157 = scmp.eq.s32.totalorder %s28, 0
      %p158 = por %p156, %p157
      %p159 = scmp.ne.s32.totalorder %s148, %s151
      %p160 = scmp.eq.s32.totalorder %s33, 1
      %p161 = por %p159, %p160
      %p162 = scmp.ne.s32.totalorder %s151, %s152
      %p163 = scmp.eq.s32.totalorder %s33, 0
      %p164 = por %p162, %p163
      %p165 = scmp.ne.s32.totalorder %s151, %s152
      %p166 = scmp.eq.s32.totalorder %s34, 1
      %p167 = por %p165, %p166
      %p169 = scmp.ne.s32.totalorder %s152, %s168
      %p170 = scmp.eq.s32.totalorder %s34, 0
      %p171 = por %p169, %p170
      %s173 = sadd.s32 %s172, 1
      %p176 = scmp.eq.s32.totalorder %s28, 1
      %p177 = scmp.ne.s32.totalorder %s172, %s174
      %p178 = scmp.eq.s32.totalorder %s28, 0
      %p179 = por %p177, %p178
      %p180 = scmp.ne.s32.totalorder %s172, %s174
      %p181 = scmp.eq.s32.totalorder %s33, 1
      %p182 = por %p180, %p181
      %p183 = scmp.ne.s32.totalorder %s174, %s175
      %p184 = scmp.eq.s32.totalorder %s33, 0
      %p185 = por %p183, %p184
      %p186 = scmp.ne.s32.totalorder %s174, %s175
      %p187 = scmp.eq.s32.totalorder %s34, 1
      %p188 = por %p186, %p187
      %p190 = scmp.ne.s32.totalorder %s175, %s189
      %p191 = scmp.eq.s32.totalorder %s34, 0
      %p192 = por %p190, %p191
      %s194 = sadd.s32 %s193, 1
      %p197 = scmp.eq.s32.totalorder %s28, 1
      %p198 = scmp.ne.s32.totalorder %s193, %s195
      %p199 = scmp.eq.s32.totalorder %s28, 0
      %p200 = por %p198, %p199
      %p201 = scmp.ne.s32.totalorder %s193, %s195
      %p202 = scmp.eq.s32.totalorder %s33, 1
      %p203 = por %p201, %p202
      %p204 = scmp.ne.s32.totalorder %s195, %s196
      %p205 = scmp.eq.s32.totalorder %s33, 0
      %p206 = por %p204, %p205
      %p207 = scmp.ne.s32.totalorder %s195, %s196
      %p208 = scmp.eq.s32.totalorder %s34, 1
      %p209 = por %p207, %p208
      %p211 = scmp.ne.s32.totalorder %s196, %s210
      %p212 = scmp.eq.s32.totalorder %s34, 0
      %p213 = por %p211, %p212
      %s215 = sadd.s32 %s214, 1
      %p218 = scmp.eq.s32.totalorder %s28, 1
      %p219 = scmp.ne.s32.totalorder %s214, %s216
      %p220 = scmp.eq.s32.totalorder %s28, 0
      %p221 = por %p219, %p220
      %p222 = scmp.ne.s32.totalorder %s214, %s216
      %p223 = scmp.eq.s32.totalorder %s33, 1
      %p224 = por %p222, %p223
      %p225 = scmp.ne.s32.totalorder %s216, %s217
      %p226 = scmp.eq.s32.totalorder %s33, 0
      %p227 = por %p225, %p226
      %p228 = scmp.ne.s32.totalorder %s216, %s217
      %p229 = scmp.eq.s32.totalorder %s34, 1
      %p230 = por %p228, %p229
      %p232 = scmp.ne.s32.totalorder %s217, %s231
      %p233 = scmp.eq.s32.totalorder %s34, 0
      %p234 = por %p232, %p233
      %s236 = sadd.s32 %s235, 1
      %p239 = scmp.eq.s32.totalorder %s28, 1
      %p240 = scmp.ne.s32.totalorder %s235, %s237
      %p241 = scmp.eq.s32.totalorder %s28, 0
      %p242 = por %p240, %p241
      %p243 = scmp.ne.s32.totalorder %s235, %s237
      %p244 = scmp.eq.s32.totalorder %s33, 1
      %p245 = por %p243, %p244
      %p246 = scmp.ne.s32.totalorder %s237, %s238
      %p247 = scmp.eq.s32.totalorder %s33, 0
      %p248 = por %p246, %p247
      %p249 = scmp.ne.s32.totalorder %s237, %s238
      %p250 = scmp.eq.s32.totalorder %s34, 1
      %p251 = por %p249, %p250
      %p253 = scmp.ne.s32.totalorder %s238, %s252
      %p254 = scmp.eq.s32.totalorder %s34, 0
      %p255 = por %p253, %p254
      %s257 = sadd.s32 %s256, 1
      %p260 = scmp.eq.s32.totalorder %s28, 1
      %p261 = scmp.ne.s32.totalorder %s256, %s258
      %p262 = scmp.eq.s32.totalorder %s28, 0
      %p263 = por %p261, %p262
      %p264 = scmp.ne.s32.totalorder %s256, %s258
      %p265 = scmp.eq.s32.totalorder %s33, 1
      %p266 = por %p264, %p265
      %p267 = scmp.ne.s32.totalorder %s258, %s259
      %p268 = scmp.eq.s32.totalorder %s33, 0
      %p269 = por %p267, %p268
      %p270 = scmp.ne.s32.totalorder %s258, %s259
      %p271 = scmp.eq.s32.totalorder %s34, 1
      %p272 = por %p270, %p271
      %p274 = scmp.ne.s32.totalorder %s259, %s273
      %p275 = scmp.eq.s32.totalorder %s34, 0
      %p276 = por %p274, %p275
      %s278 = sadd.s32 %s277, 1
      %p281 = scmp.eq.s32.totalorder %s28, 1
      %p282 = scmp.ne.s32.totalorder %s277, %s279
      %p283 = scmp.eq.s32.totalorder %s28, 0
      %p284 = por %p282, %p283
      %p285 = scmp.ne.s32.totalorder %s277, %s279
      %p286 = scmp.eq.s32.totalorder %s33, 1
      %p287 = por %p285, %p286
      %p288 = scmp.ne.s32.totalorder %s279, %s280
      %p289 = scmp.eq.s32.totalorder %s33, 0
      %p290 = por %p288, %p289
      %p291 = scmp.ne.s32.totalorder %s279, %s280
      %p292 = scmp.eq.s32.totalorder %s34, 1
      %p293 = por %p291, %p292
      %p295 = scmp.ne.s32.totalorder %s280, %s294
      %p296 = scmp.eq.s32.totalorder %s34, 0
      %p297 = por %p295, %p296
      %s299 = sadd.s32 %s298, 1
      %p302 = scmp.eq.s32.totalorder %s28, 1
      %p303 = scmp.ne.s32.totalorder %s298, %s300
      %p304 = scmp.eq.s32.totalorder %s28, 0
      %p305 = por %p303, %p304
      %p306 = scmp.ne.s32.totalorder %s298, %s300
      %p307 = scmp.eq.s32.totalorder %s33, 1
      %p308 = por %p306, %p307
      %p309 = scmp.ne.s32.totalorder %s300, %s301
      %p310 = scmp.eq.s32.totalorder %s33, 0
      %p311 = por %p309, %p310
      %p312 = scmp.ne.s32.totalorder %s300, %s301
      %p313 = scmp.eq.s32.totalorder %s34, 1
      %p314 = por %p312, %p313
      %p316 = scmp.ne.s32.totalorder %s301, %s315
      %p317 = scmp.eq.s32.totalorder %s34, 0
      %p318 = por %p316, %p317
      %s320 = sadd.s32 %s319, 1
      %p323 = scmp.eq.s32.totalorder %s28, 1
      %p324 = scmp.ne.s32.totalorder %s319, %s321
      %p325 = scmp.eq.s32.totalorder %s28, 0
      %p326 = por %p324, %p325
      %p327 = scmp.ne.s32.totalorder %s319, %s321
      %p328 = scmp.eq.s32.totalorder %s33, 1
      %p329 = por %p327, %p328
      %p330 = scmp.ne.s32.totalorder %s321, %s322
      %p331 = scmp.eq.s32.totalorder %s33, 0
      %p332 = por %p330, %p331
      %p333 = scmp.ne.s32.totalorder %s321, %s322
      %p334 = scmp.eq.s32.totalorder %s34, 1
      %p335 = por %p333, %p334
      %p337 = scmp.ne.s32.totalorder %s322, %s336
      %p338 = scmp.eq.s32.totalorder %s34, 0
      %p339 = por %p337, %p338
      %s341 = sadd.s32 %s340, 1
      %p344 = scmp.eq.s32.totalorder %s28, 1
      %p345 = scmp.ne.s32.totalorder %s340, %s342
      %p346 = scmp.eq.s32.totalorder %s28, 0
      %p347 = por %p345, %p346
      %p348 = scmp.ne.s32.totalorder %s340, %s342
      %p349 = scmp.eq.s32.totalorder %s33, 1
      %p350 = por %p348, %p349
      %p351 = scmp.ne.s32.totalorder %s342, %s343
      %p352 = scmp.eq.s32.totalorder %s33, 0
      %p353 = por %p351, %p352
      %p354 = scmp.ne.s32.totalorder %s342, %s343
      %p355 = scmp.eq.s32.totalorder %s34, 1
      %p356 = por %p354, %p355
      %p358 = scmp.ne.s32.totalorder %s343, %s357
      %p359 = scmp.eq.s32.totalorder %s34, 0
      %p360 = por %p358, %p359
      %s361 = ssub.s32 %s35, %s47
      %p362 = scmp.eq.s32.totalorder %s361, 0
      %s364 = sadd.s32 %s363, 1
      %s365 = scalar_select %p362, %s363, %s364
      %p368 = pneg %p362
      %p369 = scmp.eq.s32.totalorder %s28, 1
      %p370 = por %p368, %p369
      %p371 = scmp.ne.s32.totalorder %s363, %s366
      %p372 = scmp.eq.s32.totalorder %s28, 0
      %p373 = por %p371, %p372
      %p374 = scmp.ne.s32.totalorder %s363, %s366
      %p375 = scmp.eq.s32.totalorder %s33, 1
      %p376 = por %p374, %p375
      %p377 = scmp.ne.s32.totalorder %s366, %s367
      %p378 = scmp.eq.s32.totalorder %s33, 0
      %p379 = por %p377, %p378
      %p380 = scmp.ne.s32.totalorder %s366, %s367
      %p381 = scmp.eq.s32.totalorder %s34, 1
      %p382 = por %p380, %p381
      %p384 = scmp.ne.s32.totalorder %s367, %s383
      %p385 = scmp.eq.s32.totalorder %s34, 0
      %p386 = por %p384, %p385
      %s387 = ssub.s32 %s35, %s47
      %p388 = scmp.eq.s32.totalorder %s387, 0
      %s390 = sadd.s32 %s389, 1
      %s391 = scalar_select %p388, %s389, %s390
      %p394 = pneg %p388
      %p395 = scmp.eq.s32.totalorder %s28, 1
      %p396 = por %p394, %p395
      %p397 = scmp.ne.s32.totalorder %s389, %s392
      %p398 = scmp.eq.s32.totalorder %s28, 0
      %p399 = por %p397, %p398
      %p400 = scmp.ne.s32.totalorder %s389, %s392
      %p401 = scmp.eq.s32.totalorder %s33, 1
      %p402 = por %p400, %p401
      %p403 = scmp.ne.s32.totalorder %s392, %s393
      %p404 = scmp.eq.s32.totalorder %s33, 0
      %p405 = por %p403, %p404
      %p406 = scmp.ne.s32.totalorder %s392, %s393
      %p407 = scmp.eq.s32.totalorder %s34, 1
      %p408 = por %p406, %p407
      %p410 = scmp.ne.s32.totalorder %s393, %s409
      %p411 = scmp.eq.s32.totalorder %s34, 0
      %p412 = por %p410, %p411
      %s413 = ssub.s32 %s35, %s47
      %p414 = scmp.eq.s32.totalorder %s413, 0
      %s416 = sadd.s32 %s415, 1
      %s417 = scalar_select %p414, %s415, %s416
      %p420 = pneg %p414
      %p421 = scmp.eq.s32.totalorder %s28, 1
      %p422 = por %p420, %p421
      %p423 = scmp.ne.s32.totalorder %s415, %s418
      %p424 = scmp.eq.s32.totalorder %s28, 0
      %p425 = por %p423, %p424
      %p426 = scmp.ne.s32.totalorder %s415, %s418
      %p427 = scmp.eq.s32.totalorder %s33, 1
      %p428 = por %p426, %p427
      %p429 = scmp.ne.s32.totalorder %s418, %s419
      %p430 = scmp.eq.s32.totalorder %s33, 0
      %p431 = por %p429, %p430
      %p432 = scmp.ne.s32.totalorder %s418, %s419
      %p433 = scmp.eq.s32.totalorder %s34, 1
      %p434 = por %p432, %p433
      %p436 = scmp.ne.s32.totalorder %s419, %s435
      %p437 = scmp.eq.s32.totalorder %s34, 0
      %p438 = por %p436, %p437
      %p439 = scmp.le.s32.totalorder 1, %s28
      %p440 = scmp.lt.s32.totalorder %s28, 3
      %p441 = pnand %p439, %p440
      %p442 = pneg %p441
      // Predicated region
      $region9: #{tpu_custom_call.1} parent=5 // pred_check
        _
      $region10: #{tpu_custom_call.1} parent=5 // pred_check_branch
        %444 = sbr.rel (%p441) target = $region12
      $region11: #{tpu_custom_call.1} parent=5 // pred_region
        %s445 = ssub.s32 %s28, 1
        // Predicated region
        $region13: #{tpu_custom_call.1} parent=11 // pred_check
          %p446 = pneg %p185
        $region14: #{tpu_custom_call.1} parent=11 // pred_check_branch
          %448 = sbr.rel (%p446) target = $region16
        $region15: #{tpu_custom_call.1} parent=11 // pred_region
          _
        $region16: #{tpu_custom_call.1} parent=11 // pred_fallthru
          _
        // Predicated region
        $region17: #{tpu_custom_call.1} parent=11 // pred_check
          %p449 = pneg %p206
        $region18: #{tpu_custom_call.1} parent=11 // pred_check_branch
          %451 = sbr.rel (%p449) target = $region20
        $region19: #{tpu_custom_call.1} parent=11 // pred_region
          _
        $region20: #{tpu_custom_call.1} parent=11 // pred_fallthru
          _
        // Predicated region
        $region21: #{tpu_custom_call.1} parent=11 // pred_check
          %p452 = pneg %p227
        $region22: #{tpu_custom_call.1} parent=11 // pred_check_branch
          %454 = sbr.rel (%p452) target = $region24
        $region23: #{tpu_custom_call.1} parent=11 // pred_region
          _
        $region24: #{tpu_custom_call.1} parent=11 // pred_fallthru
          _
        // Predicated region
        $region25: #{tpu_custom_call.1} parent=11 // pred_check
          %p455 = pneg %p248
        $region26: #{tpu_custom_call.1} parent=11 // pred_check_branch
          %457 = sbr.rel (%p455) target = $region28
        $region27: #{tpu_custom_call.1} parent=11 // pred_region
          _
        $region28: #{tpu_custom_call.1} parent=11 // pred_fallthru
          _
        // Predicated region
        $region29: #{tpu_custom_call.1} parent=11 // pred_check
          %p458 = pneg %p269
        $region30: #{tpu_custom_call.1} parent=11 // pred_check_branch
          %460 = sbr.rel (%p458) target = $region32
        $region31: #{tpu_custom_call.1} parent=11 // pred_region
          _
        $region32: #{tpu_custom_call.1} parent=11 // pred_fallthru
          _
        // Predicated region
        $region33: #{tpu_custom_call.1} parent=11 // pred_check
          %p461 = pneg %p290
        $region34: #{tpu_custom_call.1} parent=11 // pred_check_branch
          %463 = sbr.rel (%p461) target = $region36
        $region35: #{tpu_custom_call.1} parent=11 // pred_region
          _
        $region36: #{tpu_custom_call.1} parent=11 // pred_fallthru
          _
        // Predicated region
        $region37: #{tpu_custom_call.1} parent=11 // pred_check
          %p464 = pneg %p311
        $region38: #{tpu_custom_call.1} parent=11 // pred_check_branch
          %466 = sbr.rel (%p464) target = $region40
        $region39: #{tpu_custom_call.1} parent=11 // pred_region
          _
        $region40: #{tpu_custom_call.1} parent=11 // pred_fallthru
          _
        // Predicated region
        $region41: #{tpu_custom_call.1} parent=11 // pred_check
          %p467 = pneg %p332
        $region42: #{tpu_custom_call.1} parent=11 // pred_check_branch
          %469 = sbr.rel (%p467) target = $region44
        $region43: #{tpu_custom_call.1} parent=11 // pred_region
          _
        $region44: #{tpu_custom_call.1} parent=11 // pred_fallthru
          _
        // Predicated region
        $region45: #{tpu_custom_call.1} parent=11 // pred_check
          %p470 = pneg %p353
        $region46: #{tpu_custom_call.1} parent=11 // pred_check_branch
          %472 = sbr.rel (%p470) target = $region48
        $region47: #{tpu_custom_call.1} parent=11 // pred_region
          _
        $region48: #{tpu_custom_call.1} parent=11 // pred_fallthru
          _
      $region12: #{tpu_custom_call.1} parent=5 // pred_fallthru
        _
      %p473 = scmp.lt.s32.totalorder %s28, 2
      // Predicated region
      $region49: #{tpu_custom_call.1} parent=5 // pred_check
        %p474 = pneg %p473
      $region50: #{tpu_custom_call.1} parent=5 // pred_check_branch
        %476 = sbr.rel (%p474) target = $region52
      $region51: #{tpu_custom_call.1} parent=5 // pred_region
        // Predicated region
        $region53: #{tpu_custom_call.1} parent=51 // pred_check
          %p477 = pneg %p66
        $region54: #{tpu_custom_call.1} parent=51 // pred_check_branch
          %479 = sbr.rel (%p477) target = $region56
        $region55: #{tpu_custom_call.1} parent=51 // pred_region
          %s480 = sadd.s32 %s35, %s36
          %p481 = scmp.lt.s32.totalorder %s480, 0
          %s482 = scalar_select %p481, %s480, 0
          %s483 = smul.u32 5, %s482
          %p484 = scmp.lt.s32.totalorder %s483, 4
          %s485 = scalar_select %p484, %s483, 4
          %s486 = smul.addr %s485, 8
          %s487 = scalar_lea.vmem %s0, %s486
          %s488 = sadd.s32 %s35, %s36
          %p489 = scmp.lt.s32.totalorder %s488, 0
          %s490 = scalar_select %p489, %s488, 0
          %s491 = smul.u32 5, %s490
        $region56: #{tpu_custom_call.1} parent=51 // pred_fallthru
          _
        // Predicated region
        $region57: #{tpu_custom_call.1} parent=51 // pred_check
          %p492 = pneg %p98
        $region58: #{tpu_custom_call.1} parent=51 // pred_check_branch
          %494 = sbr.rel (%p492) target = $region60
        $region59: #{tpu_custom_call.1} parent=51 // pred_region
          %s495 = sadd.s32 %s35, %s36
          %p496 = scmp.lt.s32.totalorder %s495, 0
          %s497 = scalar_select %p496, %s495, 0
          %s498 = smul.u32 5, %s497
          %p499 = scmp.lt.s32.totalorder %s498, 4
          %s500 = scalar_select %p499, %s498, 4
          %s501 = smul.addr %s500, 8
          %s502 = scalar_lea.vmem %s1, %s501
          %s503 = sadd.s32 %s35, %s36
          %p504 = scmp.lt.s32.totalorder %s503, 0
          %s505 = scalar_select %p504, %s503, 0
          %s506 = smul.u32 5, %s505
        $region60: #{tpu_custom_call.1} parent=51 // pred_fallthru
          _
        // Predicated region
        $region61: #{tpu_custom_call.1} parent=51 // pred_check
          %p507 = pneg %p130
        $region62: #{tpu_custom_call.1} parent=51 // pred_check_branch
          %509 = sbr.rel (%p507) target = $region64
        $region63: #{tpu_custom_call.1} parent=51 // pred_region
          %s510 = sadd.s32 %s35, %s36
          %p511 = scmp.lt.s32.totalorder %s510, 0
          %s512 = scalar_select %p511, %s510, 0
          %s513 = smul.u32 5, %s512
          %p514 = scmp.lt.s32.totalorder %s513, 4
          %s515 = scalar_select %p514, %s513, 4
          %s516 = smul.addr %s515, 8
          %s517 = scalar_lea.vmem %s2, %s516
          %s518 = sadd.s32 %s35, %s36
          %p519 = scmp.lt.s32.totalorder %s518, 0
          %s520 = scalar_select %p519, %s518, 0
          %s521 = smul.u32 5, %s520
        $region64: #{tpu_custom_call.1} parent=51 // pred_fallthru
          _
        // Predicated region
        $region65: #{tpu_custom_call.1} parent=51 // pred_check
          %p522 = pneg %p158
        $region66: #{tpu_custom_call.1} parent=51 // pred_check_branch
          %524 = sbr.rel (%p522) target = $region68
        $region67: #{tpu_custom_call.1} parent=51 // pred_region
          %s525 = sadd.s32 %s35, %s36
          %s526 = smul.u32 5, %s525
          %p527 = scmp.lt.s32.totalorder %s526, 9
          %s528 = scalar_select %p527, %s526, 9
          %s529 = smul.addr %s528, 8
          %s530 = scalar_lea.vmem %s3, %s529
          %s531 = sadd.s32 %s35, %s36
          %s532 = smul.u32 5, %s531
        $region68: #{tpu_custom_call.1} parent=51 // pred_fallthru
          _
      $region52: #{tpu_custom_call.1} parent=5 // pred_fallthru
        _
      %p533 = scmp.le.s32.totalorder 1, %s28
      %p534 = scmp.lt.s32.totalorder %s28, 3
      %p535 = pnand %p533, %p534
      %p536 = pneg %p535
      // Predicated region
      $region69: #{tpu_custom_call.1} parent=5 // pred_check
        _
      $region70: #{tpu_custom_call.1} parent=5 // pred_check_branch
        %538 = sbr.rel (%p535) target = $region72
      $region71: #{tpu_custom_call.1} parent=5 // pred_region
        %s539 = ssub.s32 %s28, 1
        %s540 = sadd.s32 %s37, %s38
        %p541 = scmp.lt.s32.totalorder %s540, 0
        %s542 = scalar_select %p541, %s540, 0
        %s543 = smul.u32 5, %s542
        %p544 = scmp.lt.s32.totalorder %s543, 4
        %s545 = scalar_select %p544, %s543, 4
        %s546 = smul.addr %s545, 8
        %s547 = scalar_lea.vmem %s0, %s546
        %p548 = pneg %p72
        %p549 = pneg %p69
        %s550 = sadd.s32 %s37, %s38
        %p551 = scmp.lt.s32.totalorder %s550, 0
        %s552 = scalar_select %p551, %s550, 0
        %s553 = smul.u32 5, %s552
        %p554 = scmp.lt.s32.totalorder %s553, 4
        %s555 = scalar_select %p554, %s553, 4
        %s556 = smul.addr %s555, 8
        %s557 = scalar_lea.vmem %s1, %s556
        %p558 = pneg %p104
        %p559 = pneg %p101
        %s560 = sadd.s32 %s37, %s38
        %p561 = scmp.lt.s32.totalorder %s560, 0
        %s562 = scalar_select %p561, %s560, 0
        %s563 = smul.u32 5, %s562
        %p564 = scmp.lt.s32.totalorder %s563, 4
        %s565 = scalar_select %p564, %s563, 4
        %s566 = smul.addr %s565, 8
        %s567 = scalar_lea.vmem %s2, %s566
        %p568 = pneg %p136
        %p569 = pneg %p133
        %s570 = sadd.s32 %s37, %s38
        %s571 = smul.u32 5, %s570
        %p572 = scmp.lt.s32.totalorder %s571, 9
        %s573 = scalar_select %p572, %s571, 9
        %s574 = smul.addr %s573, 8
        %s575 = scalar_lea.vmem %s3, %s574
        %p576 = pneg %p164
        %p577 = pneg %p161
        %p578 = pneg %p185
        %p579 = pneg %p182
        %p580 = pneg %p206
        %p581 = pneg %p203
        %p582 = pneg %p227
        %p583 = pneg %p224
        %p584 = pneg %p248
        %p585 = pneg %p245
        %p586 = pneg %p269
        %p587 = pneg %p266
        %p588 = pneg %p290
        %p589 = pneg %p287
        %p590 = pneg %p311
        %p591 = pneg %p308
        %p592 = pneg %p332
        %p593 = pneg %p329
        %p594 = pneg %p353
        %p595 = pneg %p350
        %p596 = pneg %p379
        %p597 = pneg %p376
        %s598 = sand.u32 %s366, 1
        %s599 = scalar_lea.sflag [#allocation3], %s598
        %s600 = sand.u32 %s366, 1
        %s601 = scalar_lea.vmem [#allocation2], %s600
        %p602 = pneg %p405
        %p603 = pneg %p402
        %s604 = sand.u32 %s33, 1
        %s605 = scalar_lea.sflag [#allocation5], %s604
        %s606 = sand.u32 %s392, 1
        %s607 = scalar_lea.vmem [#allocation4], %s606
        %p608 = pneg %p431
        %p609 = pneg %p428
        %s610 = sand.u32 %s33, 1
        %s611 = scalar_lea.sflag [#allocation5], %s610
        %s612 = sand.u32 %s418, 1
        %s613 = scalar_lea.vmem [#allocation6], %s612
        %s614 = sadd.s32 %s37, %s38
        %p615 = scmp.lt.s32.totalorder %s614, 0
        %s616 = scalar_select %p615, %s614, 0
        %s617 = smul.u32 5, %s616
        %p618 = scmp.lt.s32.totalorder %s617, 4
        %s619 = scalar_select %p618, %s617, 4
        %s620 = smul.addr %s619, 8
        %s621 = scalar_lea.vmem %s0, %s620
        %s622 = sadd.s32 %s37, %s38
        %p623 = scmp.lt.s32.totalorder %s622, 0
        %s624 = scalar_select %p623, %s622, 0
        %s625 = smul.u32 5, %s624
        %s626 = sadd.s32 %s37, %s38
        %p627 = scmp.lt.s32.totalorder %s626, 0
        %s628 = scalar_select %p627, %s626, 0
        %s629 = smul.u32 5, %s628
        %p630 = scmp.lt.s32.totalorder %s629, 4
        %s631 = scalar_select %p630, %s629, 4
        %s632 = smul.addr %s631, 8
        %s633 = scalar_lea.vmem %s1, %s632
        %s634 = sadd.s32 %s37, %s38
        %p635 = scmp.lt.s32.totalorder %s634, 0
        %s636 = scalar_select %p635, %s634, 0
        %s637 = smul.u32 5, %s636
        %s638 = sadd.s32 %s37, %s38
        %p639 = scmp.lt.s32.totalorder %s638, 0
        %s640 = scalar_select %p639, %s638, 0
        %s641 = smul.u32 5, %s640
        %p642 = scmp.lt.s32.totalorder %s641, 4
        %s643 = scalar_select %p642, %s641, 4
        %s644 = smul.addr %s643, 8
        %s645 = scalar_lea.vmem %s2, %s644
        %s646 = sadd.s32 %s37, %s38
        %p647 = scmp.lt.s32.totalorder %s646, 0
        %s648 = scalar_select %p647, %s646, 0
        %s649 = smul.u32 5, %s648
        %s650 = sadd.s32 %s37, %s38
        %s651 = smul.u32 5, %s650
        %p652 = scmp.lt.s32.totalorder %s651, 9
        %s653 = scalar_select %p652, %s651, 9
        %s654 = smul.addr %s653, 8
        %s655 = scalar_lea.vmem %s3, %s654
        %s656 = sadd.s32 %s37, %s38
        %s657 = smul.u32 5, %s656
        %p658 = scmp.eq.s32.totalorder %s38, 0
        // Predicated region
        $region73: #{tpu_custom_call.1} parent=71 // pred_check
          %p659 = pneg %p658
        $region74: #{tpu_custom_call.1} parent=71 // pred_check_branch
          %661 = sbr.rel (%p659) target = $region76
        $region75: #{tpu_custom_call.1} parent=71 // pred_region
          %vm662 = vcmask 253952
          %663 = vst.msk [vmem:[%s601] sm:$0x1] %vm662, 0.0
          %664 = vst.msk [vmem:[%s607] sm:$0x1] %vm662, 0.0
          %v665 = vld [vmem:[%s5] sm:$0x3]
          %v666 = vld [vmem:[%s4] sm:$0x3]
          %v667 = vsub.f32 %v665, %v666
          %v668 = vld [vmem:[%s8] sm:$0x3]
          %v669 = vld [vmem:[%s7] sm:$0x3]
          %v670 = vsub.f32 %v668, %v669
          %v671 = vld [vmem:[%s10] sm:$0x3]
          %v672 = vcvt.s32.f32 %v671
          %v673 = vadd.f32 %v672, 1.0
          %v674 = vlog2.pop %v673
          %v675 = vmul.f32 %v674, 0.6931472
          %v676 = vld [vmem:[%s11] sm:$0x3]
          %v677 = vsub.f32 %v676, %v675
          %v678 = vmul.f32 %v667, %v667
          %v679 = vld [vmem:[%s6] sm:$0x3]
          %v680 = vmul.f32 %v678, %v679
          %vm681 = vcmask 58368
          %v682 = vsel %vm681, %v680, 0.0
          %683 = vadd.xlane.f32.xlu0 %v682
          %v684 = vpop.xlane.xlu0 %683
          %vm685 = vcmask 1041408
          %v686 = vsel %vm685, %v684, 0.0
          %v687 = vrot.slane %v686, 4
          %v688 = vadd.f32 %v686, %v687
          %v689 = vrot.slane %v688, 2
          %v690 = vadd.f32 %v688, %v689
          %v691 = vrot.slane %v690, 1
          %v692 = vadd.f32 %v690, %v691
          %v693 = vmul.f32 %v670, %v670
          %v694 = vld [vmem:[%s9] sm:$0x3]
          %v695 = vmul.f32 %v693, %v694
          %v696 = vsel %vm681, %v695, 0.0
          %697 = vadd.xlane.f32.xlu0 %v696
          %v698 = vpop.xlane.xlu0 %697
          %v699 = vsel %vm685, %v698, 0.0
          %v700 = vrot.slane %v699, 4
          %v701 = vadd.f32 %v699, %v700
          %v702 = vrot.slane %v701, 2
          %v703 = vadd.f32 %v701, %v702
          %v704 = vrot.slane %v703, 1
          %v705 = vadd.f32 %v703, %v704
          %v706 = vmul.f32 %v677, %v677
          %v707 = vld [vmem:[%s12] sm:$0x3]
          %v708 = vmul.f32 %v706, %v707
          %v709 = vsel %vm681, %v708, 0.0
          %710 = vadd.xlane.f32.xlu0 %v709
          %v711 = vpop.xlane.xlu0 %710
          %v712 = vsel %vm685, %v711, 0.0
          %v713 = vrot.slane %v712, 4
          %v714 = vadd.f32 %v712, %v713
          %v715 = vrot.slane %v714, 2
          %v716 = vadd.f32 %v714, %v715
          %v717 = vrot.slane %v716, 1
          %v718 = vadd.f32 %v716, %v717
          %p719 = scmp.eq.s32.totalorder %s37, 0
          %s720 = scalar_select %p719, 1.0, 0.0
          %vm721 = vcmask 7168
          %v722 = vsel %vm721, %v692, %v705
          %vm723 = vcmask 15360
          %v724 = vsel %vm723, %v722, %v718
          %vm725 = vcmask 23552
          %v726 = vsel %vm725, %v724, 0.0
          %v727 = vstv %s720
          %v728 = vmul.f32 %v726, %v727
          %vm729 = vcmask 57344
          %730 = vst.msk [vmem:[%s613] sm:$0x1] %vm729, %v728
        $region76: #{tpu_custom_call.1} parent=71 // pred_fallthru
          _
        %v731 = vld [vmem:[%s655] sm:$0xff]
        %v732 = vld [vmem:[%s655 + $0x8] sm:$0xff]
        %v733 = vld [vmem:[%s655 + $0x10] sm:$0xff]
        %v734 = vld [vmem:[%s655 + $0x18] sm:$0xff]
        %v735 = vld [vmem:[%s655 + $0x20] sm:$0xff]
        %vm736 = vcmp.gt.f32.partialorder %v731, 0.5
        %vm737 = vcmp.gt.f32.partialorder %v732, 0.5
        %vm738 = vcmp.gt.f32.partialorder %v733, 0.5
        %vm739 = vcmp.gt.f32.partialorder %v734, 0.5
        %vm740 = vcmp.gt.f32.partialorder %v735, 0.5
        %v741 = vld [vmem:[%s621] sm:$0xff]
        %v742 = vld [vmem:[%s621 + $0x8] sm:$0xff]
        %v743 = vld [vmem:[%s621 + $0x10] sm:$0xff]
        %v744 = vld [vmem:[%s621 + $0x18] sm:$0xff]
        %v745 = vld [vmem:[%s621 + $0x20] sm:$0xff]
        %v746 = vld [vmem:[%s633] sm:$0xff]
        %v747 = vld [vmem:[%s633 + $0x8] sm:$0xff]
        %v748 = vld [vmem:[%s633 + $0x10] sm:$0xff]
        %v749 = vld [vmem:[%s633 + $0x18] sm:$0xff]
        %v750 = vld [vmem:[%s633 + $0x20] sm:$0xff]
        %v751 = vsub.f32 %v746, %v741
        %v752 = vsub.f32 %v747, %v742
        %v753 = vsub.f32 %v748, %v743
        %v754 = vsub.f32 %v749, %v744
        %v755 = vsub.f32 %v750, %v745
        %v756 = vand.u32 2147483647, %v751
        %v757 = vand.u32 2147483647, %v752
        %v758 = vand.u32 2147483647, %v753
        %v759 = vand.u32 2147483647, %v754
        %v760 = vand.u32 2147483647, %v755
        %v761 = vsel %vm736, 1, 0
        %v762 = vsel %vm737, 1, 0
        %v763 = vsel %vm738, 1, 0
        %v764 = vsel %vm739, 1, 0
        %v765 = vsel %vm740, 1, 0
        %766 = vset.pattern.permute.xlu0 0
        %767 = vperm.xlu0 %766, %v761
        %v768 = vpop.permute.xlu0 %767
        %769 = vset.pattern.permute.xlu0 0
        %770 = vperm.xlu0 %769, %v762
        %v771 = vpop.permute.xlu0 %770
        %772 = vset.pattern.permute.xlu0 0
        %773 = vperm.xlu0 %772, %v763
        %v774 = vpop.permute.xlu0 %773
        %775 = vset.pattern.permute.xlu0 0
        %776 = vperm.xlu0 %775, %v764
        %v777 = vpop.permute.xlu0 %776
        %778 = vset.pattern.permute.xlu0 0
        %779 = vperm.xlu0 %778, %v765
        %v780 = vpop.permute.xlu0 %779
        %vm781 = vcmp.eq.s32.totalorder %v768, 1
        %vm782 = vcmp.eq.s32.totalorder %v771, 1
        %vm783 = vcmp.eq.s32.totalorder %v774, 1
        %vm784 = vcmp.eq.s32.totalorder %v777, 1
        %vm785 = vcmp.eq.s32.totalorder %v780, 1
        %v786 = vsel %vm781, %v756, 0.0
        %v787 = vsel %vm782, %v757, 0.0
        %v788 = vsel %vm783, %v758, 0.0
        %v789 = vsel %vm784, %v759, 0.0
        %v790 = vsel %vm785, %v760, 0.0
        %v791 = vld [vmem:[%s645] sm:$0xff]
        %v792 = vld [vmem:[%s645 + $0x8] sm:$0xff]
        %v793 = vld [vmem:[%s645 + $0x10] sm:$0xff]
        %v794 = vld [vmem:[%s645 + $0x18] sm:$0xff]
        %v795 = vld [vmem:[%s645 + $0x20] sm:$0xff]
        %v796 = vsub.f32 %v791, %v741
        %v797 = vsub.f32 %v792, %v742
        %v798 = vsub.f32 %v793, %v743
        %v799 = vsub.f32 %v794, %v744
        %v800 = vsub.f32 %v795, %v745
        %v801 = vand.u32 2147483647, %v796
        %v802 = vand.u32 2147483647, %v797
        %v803 = vand.u32 2147483647, %v798
        %v804 = vand.u32 2147483647, %v799
        %v805 = vand.u32 2147483647, %v800
        %v806 = vsel %vm781, %v801, 0.0
        %v807 = vsel %vm782, %v802, 0.0
        %v808 = vsel %vm783, %v803, 0.0
        %v809 = vsel %vm784, %v804, 0.0
        %v810 = vsel %vm785, %v805, 0.0
        %v811 = vld [vmem:[%s601] sm:$0x1]
        %vm812 = vcmask 261120
        %v813 = vsel %vm812, %v786, 0.0
        %v814 = vsel %vm812, %v787, 0.0
        %v815 = vadd.f32 %v813, %v814
        %v816 = vsel %vm812, %v788, 0.0
        %v817 = vadd.f32 %v815, %v816
        %v818 = vsel %vm812, %v789, 0.0
        %v819 = vadd.f32 %v817, %v818
        %v820 = vsel %vm812, %v790, 0.0
        %v821 = vadd.f32 %v819, %v820
        %v822 = vrot.slane %v821, 4
        %v823 = vadd.f32 %v821, %v822
        %v824 = vrot.slane %v823, 2
        %v825 = vadd.f32 %v823, %v824
        %v826 = vrot.slane %v825, 1
        %v827 = vadd.f32 %v825, %v826
        %v828 = vadd.f32 %v811, %v827
        %vm829 = vcmask 253952
        %830 = vst.msk [vmem:[%s601] sm:$0x1] %vm829, %v828
        %v831 = vld [vmem:[%s607] sm:$0x1]
        %v832 = vsel %vm812, %v806, 0.0
        %v833 = vsel %vm812, %v807, 0.0
        %v834 = vadd.f32 %v832, %v833
        %v835 = vsel %vm812, %v808, 0.0
        %v836 = vadd.f32 %v834, %v835
        %v837 = vsel %vm812, %v809, 0.0
        %v838 = vadd.f32 %v836, %v837
        %v839 = vsel %vm812, %v810, 0.0
        %v840 = vadd.f32 %v838, %v839
        %v841 = vrot.slane %v840, 4
        %v842 = vadd.f32 %v840, %v841
        %v843 = vrot.slane %v842, 2
        %v844 = vadd.f32 %v842, %v843
        %v845 = vrot.slane %v844, 1
        %v846 = vadd.f32 %v844, %v845
        %v847 = vadd.f32 %v831, %v846
        %848 = vst.msk [vmem:[%s607] sm:$0x1] %vm829, %v847
        %s849 = sand.u32 %s366, 1
        %s850 = scalar_lea.sflag [#allocation3], %s849
        %s851 = sand.u32 %s366, 1
        %s852 = scalar_lea.vmem [#allocation2], %s851
        %s853 = sand.u32 %s33, 1
        %s854 = scalar_lea.sflag [#allocation5], %s853
        %s855 = sand.u32 %s392, 1
        %s856 = scalar_lea.vmem [#allocation4], %s855
        %s857 = sand.u32 %s33, 1
        %s858 = scalar_lea.sflag [#allocation5], %s857
        %s859 = sand.u32 %s418, 1
        %s860 = scalar_lea.vmem [#allocation6], %s859
        // Predicated region
        $region77: #{tpu_custom_call.1} parent=71 // pred_check
          %p861 = pneg %p376
        $region78: #{tpu_custom_call.1} parent=71 // pred_check_branch
          %863 = sbr.rel (%p861) target = $region80
        $region79: #{tpu_custom_call.1} parent=71 // pred_region
          %s865 = ssub.s32 16, 16
          %866 = vsyncadd %s850, %s865
          %s867 = smul.addr %s37, 16
          %s868 = scalar_lea.hbm %s13, %s867
          %s870 = sshll.u32 %s852, 4
          %s871 = int_to_ptr.vmem [resolvable:$true] %s870
          %873 = dma.vmem_to_hbm [thread:$0]  %s871, 16, %s868, %s850
        $region80: #{tpu_custom_call.1} parent=71 // pred_fallthru
          _
        // Predicated region
        $region81: #{tpu_custom_call.1} parent=71 // pred_check
          %p874 = pneg %p402
        $region82: #{tpu_custom_call.1} parent=71 // pred_check_branch
          %876 = sbr.rel (%p874) target = $region84
        $region83: #{tpu_custom_call.1} parent=71 // pred_region
          %s878 = ssub.s32 16, 16
          %879 = vsyncadd %s854, %s878
          %s880 = smul.addr %s37, 16
          %s881 = scalar_lea.hbm %s14, %s880
          %s883 = sshll.u32 %s856, 4
          %s884 = int_to_ptr.vmem [resolvable:$true] %s883
          %886 = dma.vmem_to_hbm [thread:$0]  %s884, 16, %s881, %s854
        $region84: #{tpu_custom_call.1} parent=71 // pred_fallthru
          _
        // Predicated region
        $region85: #{tpu_custom_call.1} parent=71 // pred_check
          %p887 = pneg %p428
        $region86: #{tpu_custom_call.1} parent=71 // pred_check_branch
          %889 = sbr.rel (%p887) target = $region88
        $region87: #{tpu_custom_call.1} parent=71 // pred_region
          %s891 = ssub.s32 16, 16
          %892 = vsyncadd %s858, %s891
          %s893 = smul.addr %s37, 16
          %s894 = scalar_lea.hbm %s15, %s893
          %s896 = sshll.u32 %s860, 4
          %s897 = int_to_ptr.vmem [resolvable:$true] %s896
          %899 = dma.vmem_to_hbm [thread:$0]  %s897, 16, %s894, %s858
        $region88: #{tpu_custom_call.1} parent=71 // pred_fallthru
          _
      $region72: #{tpu_custom_call.1} parent=5 // pred_fallthru
        _
      %p900 = scmp.le.s32.totalorder 2, %s28
      // Predicated region
      $region89: #{tpu_custom_call.1} parent=5 // pred_check
        %p901 = pneg %p900
      $region90: #{tpu_custom_call.1} parent=5 // pred_check_branch
        %903 = sbr.rel (%p901) target = $region92
      $region91: #{tpu_custom_call.1} parent=5 // pred_region
        %s904 = ssub.s32 %s28, 2
        // Predicated region
        $region93: #{tpu_custom_call.1} parent=91 // pred_check
          %p905 = pneg %p382
        $region94: #{tpu_custom_call.1} parent=91 // pred_check_branch
          %907 = sbr.rel (%p905) target = $region96
        $region95: #{tpu_custom_call.1} parent=91 // pred_region
          %s908 = sand.u32 %s367, 1
          %s909 = scalar_lea.sflag [#allocation3], %s908
          %s910 = sand.u32 %s367, 1
          %s911 = scalar_lea.vmem [#allocation2], %s910
          %912 = dma.done %s909, 16
        $region96: #{tpu_custom_call.1} parent=91 // pred_fallthru
          _
        // Predicated region
        $region97: #{tpu_custom_call.1} parent=91 // pred_check
          %p913 = pneg %p408
        $region98: #{tpu_custom_call.1} parent=91 // pred_check_branch
          %915 = sbr.rel (%p913) target = $region100
        $region99: #{tpu_custom_call.1} parent=91 // pred_region
          %s916 = sand.u32 %s34, 1
          %s917 = scalar_lea.sflag [#allocation5], %s916
          %s918 = sand.u32 %s393, 1
          %s919 = scalar_lea.vmem [#allocation4], %s918
          %920 = dma.done %s917, 16
        $region100: #{tpu_custom_call.1} parent=91 // pred_fallthru
          _
        // Predicated region
        $region101: #{tpu_custom_call.1} parent=91 // pred_check
          %p921 = pneg %p434
        $region102: #{tpu_custom_call.1} parent=91 // pred_check_branch
          %923 = sbr.rel (%p921) target = $region104
        $region103: #{tpu_custom_call.1} parent=91 // pred_region
          %s924 = sand.u32 %s34, 1
          %s925 = scalar_lea.sflag [#allocation5], %s924
          %s926 = sand.u32 %s419, 1
          %s927 = scalar_lea.vmem [#allocation6], %s926
          %928 = dma.done %s925, 16
        $region104: #{tpu_custom_call.1} parent=91 // pred_fallthru
          _
      $region92: #{tpu_custom_call.1} parent=5 // pred_fallthru
        _
    $region6: #{tpu_custom_call.1} parent=1 // loop_footer
      %s32 = sadd.s32 1, %s28
    $region7: #{tpu_custom_call.1} parent=1 // loop_footer_branch
      %27 = sbr.rel target = $region3
    $region8: #{tpu_custom_call.1} parent=1 // loop_exit
      _
    %929 = vsyncpa [#allocation3], 1
    %s930 = scalar_lea.sflag [#allocation3], 1
    %931 = vsyncpa %s930, 1
    %932 = vsyncpa [#allocation5], 1
    %s933 = scalar_lea.sflag [#allocation5], 1
    %934 = vsyncpa %s933, 1

</llo_original>
